<compile_context>
chip_gen: v7x
topology: tpu7x:2x2x1
jax: 0.10.0
libtpu: 0.0.40
codegen_flags: <defaults>
</compile_context>

<pallas_src>
import functools

import jax
import jax.numpy as jnp
from jax.experimental import pallas as pl
from jax.experimental.pallas import tpu as pltpu


def _celoss_kernel(logits_ref, targets_ref, alpha_ref, out_ref, acc_ref):
    pid = pl.program_id(0)

    @pl.when(pid == 0)
    def _init():
        acc_ref[...] = jnp.zeros_like(acc_ref)

    x = logits_ref[...].astype(jnp.float32)      # (TILE_N, C_pad)
    t = targets_ref[...]                         # (TILE_N, 1) int32 (-1 => padded row)
    a = alpha_ref[...].astype(jnp.float32)       # (1, C_pad)

    tn, cp = x.shape
    col = jax.lax.broadcasted_iota(jnp.int32, (tn, cp), 1)
    hit = col == t                               # bool one-hot, never materialized as f32

    # Softmax pieces over the class axis (dim=1), numerically stable.
    m = jnp.max(x, axis=1, keepdims=True)                              # (TILE_N, 1)
    e = jnp.exp(x - m)                                                 # (TILE_N, C_pad)
    denom = jnp.sum(e, axis=1, keepdims=True)                          # (TILE_N, 1)
    num = jnp.sum(jnp.where(hit, e, 0.0), axis=1, keepdims=True)       # (TILE_N, 1)

    # Divide only on the (TILE_N, 1) tensor, via the EUP reciprocal.
    probs = jnp.maximum(num * pl.reciprocal(denom, approx=True), 0.1)  # clamp(min=0.1)

    # alpha[targets]; padded rows (t == -1) hit nothing -> alpha_g = 0 -> loss 0.
    alpha_g = jnp.sum(jnp.where(hit, a, 0.0), axis=1, keepdims=True)   # (TILE_N, 1)

    tile_sum = jnp.sum(-alpha_g * jnp.log(probs))
    acc_ref[...] = acc_ref[...] + tile_sum

    @pl.when(pid == pl.num_programs(0) - 1)
    def _finalize():
        out_ref[...] = acc_ref[...]


@functools.partial(jax.jit, static_argnames=("size_average", "tile_n"))
def celoss(logits, targets, alpha, *, size_average=True, tile_n=None):
    """logits: (N, C) float (f32 or bf16), targets: (N,) int, alpha: (C,) or (C, 1)."""
    n, c = logits.shape

    # Lane-dense class axis: pad C up to a multiple of 128.
    c_pad = ((c + 127) // 128) * 128

    # Pick a batch tile: multiple of 8, sized so double-buffered logits stay
    # a few MiB at most (fits the scoped VMEM limit on v5e/v6e/v7x alike).
    if tile_n is None:
        bytes_per_row = c_pad * 4  # conservative: f32 compute width
        tile_n = max(8, min(1024, ((2 << 20) // bytes_per_row) // 8 * 8))
    n8 = ((n + 7) // 8) * 8
    tile_n = max(8, (min(tile_n, n8) // 8) * 8)
    grid_n = pl.cdiv(n8, tile_n)
    n_pad = grid_n * tile_n

    # --- Pad inputs (all padding contributes exactly 0 to the loss sum) ---
    x = logits
    if c_pad != c:
        # Padded classes get a huge negative logit: exp() underflows to 0,
        # so the softmax denominator is unchanged.
        x = jnp.concatenate(
            [x, jnp.full((n, c_pad - c), -1e30, dtype=x.dtype)], axis=1)
    if n_pad != n:
        x = jnp.concatenate([x, jnp.zeros((n_pad - n, c_pad), dtype=x.dtype)], axis=0)

    t = targets.reshape(n, 1).astype(jnp.int32)
    if n_pad != n:
        # target = -1 matches no class column -> alpha gather = 0 -> zero loss.
        t = jnp.concatenate([t, jnp.full((n_pad - n, 1), -1, jnp.int32)], axis=0)

    a = alpha.reshape(1, c).astype(jnp.float32)
    if c_pad != c:
        a = jnp.concatenate([a, jnp.zeros((1, c_pad - c), jnp.float32)], axis=1)

    total = pl.pallas_call(
        _celoss_kernel,
        out_shape=jax.ShapeDtypeStruct((1, 1), jnp.float32),
        grid=(grid_n,),
        in_specs=[
            pl.BlockSpec((tile_n, c_pad), lambda i: (i, 0)),
            pl.BlockSpec((tile_n, 1), lambda i: (i, 0)),
            pl.BlockSpec((1, c_pad), lambda i: (0, 0)),
        ],
        out_specs=pl.BlockSpec((1, 1), lambda i: (0, 0)),
        scratch_shapes=[pltpu.VMEM((1, 1), jnp.float32)],
        compiler_params=pltpu.CompilerParams(
            dimension_semantics=("arbitrary",),
            vmem_limit_bytes=32 * 1024 * 1024,
        ),
    )(x, t, a)[0, 0]

    if size_average:
        return total / n
    return total


def _ref_celoss(logits, targets, alpha, size_average=True):
    p = jax.nn.softmax(logits.astype(jnp.float32), axis=1)
    probs = jnp.maximum(p[jnp.arange(logits.shape[0]), targets], 0.1)
    batch_loss = -alpha.reshape(-1)[targets] * jnp.log(probs)
    return jnp.mean(batch_loss) if size_average else jnp.sum(batch_loss)


if __name__ == "__main__":
    key = jax.random.PRNGKey(0)
    k1, k2, k3, k4 = jax.random.split(key, 4)

    # Module __init__ default: alpha = ones(class_num, 1).
    C = 16
    alpha = jnp.ones((C, 1), dtype=jnp.float32)

    # Case 1: small single-tile case (N=8, class_num=16), size_average=True.
    N = 8
    logits = jax.random.normal(k1, (N, C), dtype=jnp.float32)
    targets = jax.random.randint(k2, (N,), 0, C, dtype=jnp.int32)
    loss = jax.block_until_ready(celoss(logits, targets, alpha, size_average=True))
    ref = _ref_celoss(logits, targets, alpha, True)
    assert jnp.allclose(loss, ref, rtol=5e-3, atol=5e-3), (loss, ref)

    # Case 2: multi-tile grid (exercises batch/class padding and the running
    # accumulator), size_average=False -> exact sum semantics.
    N2 = 300
    logits2 = jax.random.normal(k3, (N2, C), dtype=jnp.float32) * 3.0
    targets2 = jax.random.randint(k4, (N2,), 0, C, dtype=jnp.int32)
    loss2 = jax.block_until_ready(
        celoss(logits2, targets2, alpha, size_average=False, tile_n=128))
    ref2 = _ref_celoss(logits2, targets2, alpha, False)
    assert jnp.allclose(loss2, ref2, rtol=5e-3, atol=5e-3), (loss2, ref2)

    print("KERNEL_OK")
</pallas_src>

<mosaic_0001>
module attributes {stable_mosaic.version = 11 : i64} {
  func.func @_celoss_kernel(%arg0: i32, %arg1: memref<8x128xf32, #tpu.memory_space<vmem>>, %arg2: memref<8x1xi32, #tpu.memory_space<vmem>>, %arg3: memref<1x128xf32, #tpu.memory_space<vmem>>, %arg4: memref<1x1xf32, #tpu.memory_space<vmem>>, %arg5: memref<1x1xf32, #tpu.memory_space<vmem>>) attributes {dimension_semantics = [#tpu.dimension_semantics<arbitrary>], iteration_bounds = array<i64: 1>, scalar_prefetch = 0 : i64, scratch_operands = 1 : i64, tpu.core_type = #tpu.core_type<tc>, window_params = [{transform_indices = @transform_0, window_bounds = array<i64: 8, 128>}, {transform_indices = @transform_1, window_bounds = array<i64: 8, 1>}, {pipeline_mode = #tpu.pipeline_mode<synchronous>, transform_indices = @transform_2, window_bounds = array<i64: 1, 128>}, {pipeline_mode = #tpu.pipeline_mode<synchronous>, transform_indices = @transform_3, window_bounds = array<i64: 1, 1>}]} {
    %c0_i32 = arith.constant 0 : i32
    %0 = arith.cmpi eq, %arg0, %c0_i32 : i32
    %1 = arith.extui %0 : i1 to i32
    %c0_i32_0 = arith.constant 0 : i32
    %2 = arith.cmpi ne, %1, %c0_i32_0 : i32
    scf.if %2 {
      %cst_20 = arith.constant 0.000000e+00 : f32
      %45 = vector.broadcast %cst_20 : f32 to vector<1x1xf32>
      %c0_21 = arith.constant 0 : index
      %c0_22 = arith.constant 0 : index
      %46 = vector.load %arg5[%c0_21, %c0_22] : memref<1x1xf32, #tpu.memory_space<vmem>>, vector<1x1xf32>
      tpu.vector_store %arg5[%c0_21, %c0_22], %45 {strides = array<i32>} : memref<1x1xf32, #tpu.memory_space<vmem>>, vector<1x1xf32>,
    } else {
    }
    %c0 = arith.constant 0 : index
    %c0_1 = arith.constant 0 : index
    %3 = vector.load %arg1[%c0, %c0_1] : memref<8x128xf32, #tpu.memory_space<vmem>>, vector<8x128xf32>
    %c0_2 = arith.constant 0 : index
    %c0_3 = arith.constant 0 : index
    %4 = vector.load %arg2[%c0_2, %c0_3] : memref<8x1xi32, #tpu.memory_space<vmem>>, vector<8x1xi32>
    %c0_4 = arith.constant 0 : index
    %c0_5 = arith.constant 0 : index
    %5 = vector.load %arg3[%c0_4, %c0_5] : memref<1x128xf32, #tpu.memory_space<vmem>>, vector<1x128xf32>
    %6 = tpu.iota {dimensions = array<i32: 1>} : vector<8x128xi32>
    %7 = vector.broadcast %4 : vector<8x1xi32> to vector<8x128xi32>
    %8 = arith.cmpi eq, %6, %7 : vector<8x128xi32>
    %cst = arith.constant dense<0xFF800000> : vector<8xf32>
    %9 = vector.multi_reduction <maximumf>, %3, %cst [1] : vector<8x128xf32> to vector<8xf32>
    %10 = vector.shape_cast %9 : vector<8xf32> to vector<8x1xf32>
    %11 = vector.broadcast %10 : vector<8x1xf32> to vector<8x128xf32>
    %12 = arith.subf %3, %11 : vector<8x128xf32>
    %13 = math.exp %12 : vector<8x128xf32>
    %cst_6 = arith.constant dense<0.000000e+00> : vector<8xf32>
    %14 = vector.multi_reduction <add>, %13, %cst_6 [1] : vector<8x128xf32> to vector<8xf32>
    %15 = vector.shape_cast %14 : vector<8xf32> to vector<8x1xf32>
    %cst_7 = arith.constant 0.000000e+00 : f32
    %16 = vector.broadcast %cst_7 : f32 to vector<8x128xf32>
    %17 = arith.select %8, %13, %16 : vector<8x128xi1>, vector<8x128xf32>
    %cst_8 = arith.constant dense<0.000000e+00> : vector<8xf32>
    %18 = vector.multi_reduction <add>, %17, %cst_8 [1] : vector<8x128xf32> to vector<8xf32>
    %19 = vector.shape_cast %18 : vector<8xf32> to vector<8x1xf32>
    %20 = tpu.reciprocal %15 {approx = true} : vector<8x1xf32> -> vector<8x1xf32>
    %21 = arith.mulf %19, %20 : vector<8x1xf32>
    %cst_9 = arith.constant 1.000000e-01 : f32
    %22 = vector.broadcast %cst_9 : f32 to vector<8x1xf32>
    %23 = arith.maximumf %21, %22 : vector<8x1xf32>
    %cst_10 = arith.constant 0.000000e+00 : f32
    %24 = vector.shape_cast %5 : vector<1x128xf32> to vector<1x128xf32>
    %25 = vector.broadcast %24 : vector<1x128xf32> to vector<8x128xf32>
    %26 = vector.broadcast %cst_10 : f32 to vector<8x128xf32>
    %27 = arith.select %8, %25, %26 : vector<8x128xi1>, vector<8x128xf32>
    %cst_11 = arith.constant dense<0.000000e+00> : vector<8xf32>
    %28 = vector.multi_reduction <add>, %27, %cst_11 [1] : vector<8x128xf32> to vector<8xf32>
    %29 = vector.shape_cast %28 : vector<8xf32> to vector<8x1xf32>
    %cst_12 = arith.constant 0.000000e+00 : f32
    %30 = vector.broadcast %cst_12 : f32 to vector<8x1xf32>
    %31 = arith.subf %30, %29 : vector<8x1xf32>
    %32 = math.log %23 : vector<8x1xf32>
    %33 = arith.mulf %31, %32 : vector<8x1xf32>
    %34 = vector.shape_cast %33 : vector<8x1xf32> to vector<1x8x1xf32>
    %cst_13 = arith.constant dense<0.000000e+00> : vector<1xf32>
    %35 = vector.multi_reduction <add>, %34, %cst_13 [1, 2] : vector<1x8x1xf32> to vector<1xf32>
    %36 = vector.shape_cast %35 : vector<1xf32> to vector<1x1x1xf32>
    %37 = vector.extract %36[0, 0, 0] : f32 from vector<1x1x1xf32>
    %c0_14 = arith.constant 0 : index
    %c0_15 = arith.constant 0 : index
    %38 = vector.load %arg5[%c0_14, %c0_15] : memref<1x1xf32, #tpu.memory_space<vmem>>, vector<1x1xf32>
    %39 = vector.broadcast %37 : f32 to vector<1x1xf32>
    %40 = arith.addf %38, %39 : vector<1x1xf32>
    %c0_16 = arith.constant 0 : index
    %c0_17 = arith.constant 0 : index
    %41 = vector.load %arg5[%c0_16, %c0_17] : memref<1x1xf32, #tpu.memory_space<vmem>>, vector<1x1xf32>
    tpu.vector_store %arg5[%c0_16, %c0_17], %40 {strides = array<i32>} : memref<1x1xf32, #tpu.memory_space<vmem>>, vector<1x1xf32>,
    %c0_i32_18 = arith.constant 0 : i32
    %42 = arith.cmpi eq, %arg0, %c0_i32_18 : i32
    %43 = arith.extui %42 : i1 to i32
    %c0_i32_19 = arith.constant 0 : i32
    %44 = arith.cmpi ne, %43, %c0_i32_19 : i32
    scf.if %44 {
      %c0_20 = arith.constant 0 : index
      %c0_21 = arith.constant 0 : index
      %45 = vector.load %arg5[%c0_20, %c0_21] : memref<1x1xf32, #tpu.memory_space<vmem>>, vector<1x1xf32>
      %c0_22 = arith.constant 0 : index
      %c0_23 = arith.constant 0 : index
      %46 = vector.load %arg4[%c0_22, %c0_23] : memref<1x1xf32, #tpu.memory_space<vmem>>, vector<1x1xf32>
      tpu.vector_store %arg4[%c0_22, %c0_23], %45 {strides = array<i32>} : memref<1x1xf32, #tpu.memory_space<vmem>>, vector<1x1xf32>,
    } else {
    }
    return
  }
  func.func @transform_0(%arg0: i32) -> (i32, i32) {
    %c0_i32 = arith.constant 0 : i32
    %c0_i32_0 = arith.constant 0 : i32
    return %arg0, %c0_i32 : i32, i32
  }
  func.func @transform_1(%arg0: i32) -> (i32, i32) {
    %c0_i32 = arith.constant 0 : i32
    %c0_i32_0 = arith.constant 0 : i32
    return %arg0, %c0_i32 : i32, i32
  }
  func.func @transform_2(%arg0: i32) -> (i32, i32) {
    %c0_i32 = arith.constant 0 : i32
    %c0_i32_0 = arith.constant 0 : i32
    %c0_i32_1 = arith.constant 0 : i32
    return %c0_i32, %c0_i32_0 : i32, i32
  }
  func.func @transform_3(%arg0: i32) -> (i32, i32) {
    %c0_i32 = arith.constant 0 : i32
    %c0_i32_0 = arith.constant 0 : i32
    %c0_i32_1 = arith.constant 0 : i32
    return %c0_i32, %c0_i32_0 : i32, i32
  }
}

</mosaic_0001>

<llo_original>
// kernel: celoss.1
$region0: #{celoss.1}
  #allocation0 [shape = 'u32[]', space=smem, size = 0x4, offset = 0x4, fixed_abs, tag = 'smem constant byte address 0x4 - core index']
  #allocation1 [shape = 'u32[144,128]{1,0:T(1,128)}', space=vmem, size = 0x12000, scoped, tag = 'internal scratch']
  #allocation2 [shape = 'f32[1,1]{1,0:T(1,128)}', space=vmem, size = 0x200, scoped, tag = 'scratch operand']
  %s0 = inlined_call_operand.vmem [shape: f32[8,128], index: 0, kind: input, shape index: {}]
  %s1 = inlined_call_operand.vmem [shape: s32[8,1], index: 1, kind: input, shape index: {}]
  %s2 = inlined_call_operand.vmem [shape: f32[1,128], index: 2, kind: input, shape index: {}]
  %s3 = inlined_call_operand.hbm [shape: f32[1,1], index: 3, kind: output, shape index: {}]
  %s4 = sld [smem:[#allocation0]]
  $region30: #{celoss.1} parent=0
    _
  %s6 = ssub.s32 1, %s4
  %s7 = scalar_select 0, %s6, %s4
  $region1: #{celoss.1} parent=0
    #allocation3 [shape = 'u8[512]{0}', space=vmem, size = 0x400, scoped, tag = 'output window, operand 0, single buffered']
    #allocation4 [shape = 's32[1]{0}', space=sflag, size = 0x4, scoped, tag = 'scoped memory for celoss.1']
    %8 = vsyncpa [#allocation4], 0
    // Predicated region
    $region2: #{celoss.1} parent=1 // pred_check
      _
    $region3: #{celoss.1} parent=1 // pred_check_branch
      %10 = sbr.rel (0) target = $region5
    $region4: #{celoss.1} parent=1 // pred_region
      _
    $region5: #{celoss.1} parent=1 // pred_fallthru
      _
    // Predicated region
    $region6: #{celoss.1} parent=1 // pred_check
      _
    $region7: #{celoss.1} parent=1 // pred_check_branch
      %12 = sbr.rel (0) target = $region9
    $region8: #{celoss.1} parent=1 // pred_region
      _
    $region9: #{celoss.1} parent=1 // pred_fallthru
      _
    // Predicated region
    $region10: #{celoss.1} parent=1 // pred_check
      _
    $region11: #{celoss.1} parent=1 // pred_check_branch
      %14 = sbr.rel (0) target = $region13
    $region12: #{celoss.1} parent=1 // pred_region
      _
    $region13: #{celoss.1} parent=1 // pred_fallthru
      _
    %p15 = scmp.eq.s32.totalorder 0, 0
    // Predicated region
    $region14: #{celoss.1} parent=1 // pred_check
      %p16 = pneg %p15
    $region15: #{celoss.1} parent=1 // pred_check_branch
      %18 = sbr.rel (%p16) target = $region17
    $region16: #{celoss.1} parent=1 // pred_region
      %vm19 = vcmask 0
      %20 = vst.msk [vmem:[#allocation2] sm:$0x1] %vm19, 0.0
    $region17: #{celoss.1} parent=1 // pred_fallthru
      _
    %v21 = vld [vmem:[%s0] sm:$0xff]
    %v22 = vld [vmem:[%s1] sm:$0xff]
    %v23 = vld [vmem:[%s2] sm:$0x1]
    %v24 = vlaneseq
    %v25 = vand.u32 %v24, 127
    %26 = vset.pattern.permute.xlu0 0
    %27 = vperm.xlu0 %26, %v22
    %v28 = vpop.permute.xlu0 %27
    %vm29 = vcmp.eq.s32.totalorder %v25, %v28
    %30 = vmax.xlane.f32.xlu0 %v21
    %v31 = vpop.xlane.xlu0 %30
    %v32 = vsub.f32 %v21, %v31
    %v33 = vmul.f32 %v32, 1.442695
    %v34 = vpow.pop %v33
    %35 = vadd.xlane.f32.xlu0 %v34
    %v36 = vpop.xlane.xlu0 %35
    %v37 = vsel %vm29, %v34, 0.0
    %38 = vadd.xlane.f32.xlu0 %v37
    %v39 = vpop.xlane.xlu0 %38
    %v40 = vrcp.pop %v36
    %v41 = vmul.f32 %v39, %v40
    %v42 = vmax.f32 %v41, 0.1
    %v44 = vlaneseq
    %v45 = vshrl.u32 %v44, 7
    %v46 = vsub.s32 0, %v45
    %v47 = vrot.slane %v23, %v46
    %v49 = vsel %vm29, %v47, 0.0
    %50 = vadd.xlane.f32.xlu0 %v49
    %v51 = vpop.xlane.xlu0 %50
    %v52 = vsub.f32 0.0, %v51
    %v53 = vlog2.pop %v42
    %v54 = vmul.f32 %v53, 0.6931472
    %v55 = vmul.f32 %v52, %v54
    %vm56 = vcmask 7168
    %v57 = vsel %vm56, %v55, 0.0
    %58 = vadd.xlane.f32.xlu0 %v57
    %v59 = vpop.xlane.xlu0 %58
    %v60 = vrot.slane %v59, 4
    %v61 = vadd.f32 %v59, %v60
    %v62 = vrot.slane %v61, 2
    %v63 = vadd.f32 %v61, %v62
    %v64 = vrot.slane %v63, 1
    %v65 = vadd.f32 %v63, %v64
    %s66 = vtos %v65
    %v67 = vld [vmem:[#allocation2] sm:$0x1]
    %v68 = vstv %s66
    %v69 = vadd.f32 %v67, %v68
    %vm70 = vcmask 0
    %71 = vst.msk [vmem:[#allocation2] sm:$0x1] %vm70, %v69
    // Predicated region
    $region18: #{celoss.1} parent=1 // pred_check
      %p72 = pneg %p15
    $region19: #{celoss.1} parent=1 // pred_check_branch
      %74 = sbr.rel (%p72) target = $region21
    $region20: #{celoss.1} parent=1 // pred_region
      %v75 = vld [vmem:[#allocation2] sm:$0x1]
      %76 = vst.msk [vmem:[#allocation3] sm:$0x1] %vm70, %v75
    $region21: #{celoss.1} parent=1 // pred_fallthru
      _
    // Predicated region
    $region22: #{celoss.1} parent=1 // pred_check
      _
    $region23: #{celoss.1} parent=1 // pred_check_branch
      %78 = sbr.rel (0) target = $region25
    $region24: #{celoss.1} parent=1 // pred_region
      %s80 = ssub.s32 16, 16
      %81 = vsyncadd [#allocation4], %s80
      %s83 = sshll.u32 [#allocation3], 4
      %s84 = int_to_ptr.vmem [resolvable:$true] %s83
      %86 = dma.vmem_to_hbm [thread:$0]  %s84, 16, %s3, [#allocation4]
    $region25: #{celoss.1} parent=1 // pred_fallthru
      _
    // Predicated region
    $region26: #{celoss.1} parent=1 // pred_check
      _
    $region27: #{celoss.1} parent=1 // pred_check_branch
      %88 = sbr.rel (0) target = $region29
    $region28: #{celoss.1} parent=1 // pred_region
      %89 = dma.done [#allocation4], 16
    $region29: #{celoss.1} parent=1 // pred_fallthru
      _
    %90 = vsyncpa [#allocation4], 1

</llo_original>
